<compile_context>
chip_gen: v6e
topology: v6e:2x2x1
jax: 0.10.0
libtpu: 0.0.40
codegen_flags: <defaults>
</compile_context>

<pallas_src>
import functools

import jax
import jax.numpy as jnp
from jax.experimental import pallas as pl
from jax.experimental.pallas import tpu as pltpu


def _cdiv(a, b):
    return -(-a // b)


def _bilinear_matrix(in_size, out_size):
    """Interpolation matrix matching F.interpolate(mode='bilinear', align_corners=False)."""
    scale = in_size / out_size
    i = jnp.arange(out_size, dtype=jnp.float32)
    src = (i + 0.5) * scale - 0.5
    src = jnp.maximum(src, 0.0)                      # PyTorch clamps negative source coords
    i0 = jnp.minimum(jnp.floor(src).astype(jnp.int32), in_size - 1)
    i1 = jnp.minimum(i0 + 1, in_size - 1)
    frac = src - i0.astype(jnp.float32)
    rows = jnp.arange(out_size)
    U = jnp.zeros((out_size, in_size), jnp.float32)
    U = U.at[rows, i0].add(1.0 - frac)
    U = U.at[rows, i1].add(frac)
    return U                                          # (out_size, in_size)


def spectral_norm_weight(weight, u, n_power_iterations=1, eps=1e-12):
    """SpectralNorm on the conv weight (one power iteration, PyTorch-style)."""
    c_out = weight.shape[0]
    wm = weight.reshape(c_out, -1)
    v = None
    for _ in range(n_power_iterations):
        v = wm.T @ u
        v = v / (jnp.linalg.norm(v) + eps)
        u = wm @ v
        u = u / (jnp.linalg.norm(u) + eps)
    sigma = u @ (wm @ v)
    return weight / sigma


def _has_two_tensorcores():
    """True on chips with 2 TensorCores (v7x): keep 2 'parallel' grid steps there."""
    try:
        kind = jax.devices()[0].device_kind.lower()
    except Exception:
        return False
    return "7" in kind


def _choose_q_tile(p, q, budget_bytes=8 << 20):
    """Tile Q when the (P, Q) Kronecker matrix (double-buffered) would eat too much VMEM.

    At 16x16 spatial (P=256, Q=1024) this returns Q (single tile); the guard only kicks
    in when spatial size grows (Q*P*4 is quadratic in H*W) -- important on v7x (64 MiB)."""
    if 2 * p * q * 4 <= budget_bytes or q % 128 != 0:
        return q
    max_tq = max(128, (budget_bytes // (2 * p * 4)) // 128 * 128)
    for tq in range(min(max_tq, q), 127, -128):
        if q % tq == 0:
            return tq
    return q


def _max_batch_block(kk, p, c_out, tq, budget_bytes=40 << 20, cap=32):
    """Largest per-step batch block that fits the VMEM budget.

    cap=32 => stacked matmul M = 32*C_out = 256 rows, which already saturates the
    256-wide MXU on v6e/v7x (and two 128-row blocks on v5e); going higher only adds
    code bloat in the conv loop."""
    per_sample = 4 * (2 * kk * p          # patches block (double-buffered)
                      + 2 * c_out * tq    # output block (double-buffered)
                      + c_out * p)        # f32 conv scratch (single copy)
    resident = 4 * (2 * p * tq + 2 * c_out * kk)   # m + wmat (double-buffered)
    return int(max(1, min(cap, (budget_bytes - resident) // per_sample)))


def _conv_upsample_kernel(nb, c_out, patches_ref, wmat_ref, m_ref, out_ref, conv_ref):
    # patches_ref: (nb, KK, P)      KK = KH*KW*C_in + 1 (bias row of ones appended)
    # wmat_ref:    (C_out, KK)      bias column appended
    # m_ref:       (P, TQ)          fused bilinear-upsample Kronecker matrix tile
    # out_ref:     (nb*C_out, TQ)   lane-dense output slab (TQ multiple of 128)
    # conv_ref:    (nb*C_out, P)    f32 scratch holding the stacked conv results

    # Compute the conv once per batch block (first Q tile); scratch persists across q.
    @pl.when(pl.program_id(1) == 0)
    def _():
        w = wmat_ref[...]
        # Small static, store-terminated loop (nb <= 32): each (C_out, P) result is
        # written to scratch immediately, so the live set stays ~2 vregs per iteration.
        for b in range(nb):
            conv_ref[b * c_out:(b + 1) * c_out, :] = jnp.dot(
                w, patches_ref[b], preferred_element_type=jnp.float32)

    # ONE stacked MXU matmul: (nb*C_out, P) @ (P, TQ) -> (nb*C_out, TQ).
    out_ref[...] = jnp.dot(conv_ref[...], m_ref[...],
                           preferred_element_type=jnp.float32).astype(out_ref.dtype)


def upsample_conv2d(x, weight, bias, *, padding=1, scale_factor=2):
    N, C_in, H, W = x.shape
    C_out, _, KH, KW = weight.shape
    Ho, Wo = H, W                                     # stride-1 'same' conv (padding = (K-1)//2)
    H2, W2 = Ho * scale_factor, Wo * scale_factor
    P, Q = Ho * Wo, H2 * W2
    KK = KH * KW * C_in + 1

    # --- Generation/VMEM-aware batch blocking --------------------------------
    tq = _choose_q_tile(P, Q)
    nq = Q // tq
    steps_target = 2 if (_has_two_tensorcores() and N >= 2) else 1
    nb = max(1, min(_max_batch_block(KK, P, C_out, tq), _cdiv(N, steps_target)))
    num_steps = _cdiv(N, nb)
    N_pad = nb * num_steps
    if N_pad != N:
        # Pad batch so nb always divides it (avoids nb=1 degradation for odd/prime N).
        x = jnp.pad(x, ((0, N_pad - N), (0, 0), (0, 0), (0, 0)))

    # --- Wrapper-side layout work (XLA): pad + im2col, lane-dense last dim = H*W. ---
    xpad = jnp.pad(x, ((0, 0), (0, 0), (padding, padding), (padding, padding)))
    cols = []
    for kh in range(KH):
        for kw in range(KW):
            cols.append(xpad[:, :, kh:kh + Ho, kw:kw + Wo].reshape(N_pad, C_in, P))
    patches = jnp.concatenate(cols, axis=1)                          # (N_pad, KH*KW*C_in, P)
    patches = jnp.concatenate(                                       # fold bias: ones row
        [patches, jnp.ones((N_pad, 1, P), patches.dtype)], axis=1).astype(jnp.float32)

    wmat = jnp.transpose(weight, (0, 2, 3, 1)).reshape(C_out, KH * KW * C_in)
    wmat = jnp.concatenate([wmat, bias.reshape(C_out, 1)], axis=1).astype(jnp.float32)

    # Fused bilinear upsample as a single matmul: M = (U_H kron U_W)^T, shape (P, Q).
    uh = _bilinear_matrix(Ho, H2)                                    # (H2, Ho)
    uw = _bilinear_matrix(Wo, W2)                                    # (W2, Wo)
    m = jnp.kron(uh, uw).T.astype(jnp.float32)                       # (P, Q)

    nbC = nb * C_out
    # Explicit VMEM accounting (blocks double-buffered by the auto-pipeline).
    vmem_need = 4 * (2 * nb * KK * P + 2 * nbC * tq + 2 * P * tq + 2 * C_out * KK + nbC * P)
    vmem_limit = int(min(max(2 * vmem_need, 16 << 20), 48 << 20))    # <= 48 MiB (v7x has 64 MiB)

    out_flat = pl.pallas_call(
        functools.partial(_conv_upsample_kernel, nb, C_out),
        out_shape=jax.ShapeDtypeStruct((N_pad * C_out, Q), x.dtype),
        grid=(num_steps, nq),
        in_specs=[
            pl.BlockSpec((nb, KK, P), lambda n, q: (n, 0, 0)),       # per-step patch slab
            pl.BlockSpec((C_out, KK), lambda n, q: (0, 0)),          # resident weight (bias fused)
            pl.BlockSpec((P, tq), lambda n, q: (0, q)),              # Kronecker matrix (Q-tiled)
        ],
        out_specs=pl.BlockSpec((nbC, tq), lambda n, q: (n, q)),      # lane-dense stacked slab
        scratch_shapes=[pltpu.VMEM((nbC, P), jnp.float32)],          # stacked conv results
        compiler_params=pltpu.CompilerParams(
            dimension_semantics=("parallel", "arbitrary"),
            vmem_limit_bytes=vmem_limit),
    )(patches, wmat, m)

    out = out_flat.reshape(N_pad, C_out, H2, W2)
    return out[:N] if N_pad != N else out


if __name__ == "__main__":
    # Module config: in_channels=4, out_channels=8, kernel_size=3, padding=1, scale_factor=2
    N, C_in, C_out, H, W, K = 2, 4, 8, 16, 16, 3

    key = jax.random.PRNGKey(0)
    kx, kw, kb, ku = jax.random.split(key, 4)
    x = jax.random.normal(kx, (N, C_in, H, W), dtype=jnp.float32)
    weight_raw = jax.random.normal(kw, (C_out, C_in, K, K), dtype=jnp.float32) * 0.1
    bias = jax.random.normal(kb, (C_out,), dtype=jnp.float32) * 0.1
    u = jax.random.normal(ku, (C_out,), dtype=jnp.float32)
    u = u / (jnp.linalg.norm(u) + 1e-12)

    # SpectralNorm(conv).weight: normalized by largest singular value (1 power iteration).
    weight = spectral_norm_weight(weight_raw, u)

    out = upsample_conv2d(x, weight, bias, padding=1, scale_factor=2)
    out = jax.block_until_ready(out)
    assert out.shape == (N, C_out, 2 * H, 2 * W), out.shape

    # Pure-JAX reference (same math) as a sanity check of the Pallas kernel.
    ref_conv = jax.lax.conv_general_dilated(
        x, weight, window_strides=(1, 1), padding=((1, 1), (1, 1)),
        dimension_numbers=("NCHW", "OIHW", "NCHW")) + bias.reshape(1, -1, 1, 1)
    uh = _bilinear_matrix(H, 2 * H)
    uw = _bilinear_matrix(W, 2 * W)
    ref = jnp.einsum("Hh,nchw->ncHw", uh, ref_conv)
    ref = jnp.einsum("Ww,ncHw->ncHW", uw, ref)
    assert jnp.allclose(out, ref, atol=1e-4, rtol=1e-4)

    print("KERNEL_OK")
</pallas_src>

<mosaic_0001>
module attributes {stable_mosaic.version = 11 : i64} {
  func.func @_conv_upsample_kernel(%arg0: i32, %arg1: i32, %arg2: memref<2x37x256xf32, #tpu.memory_space<vmem>>, %arg3: memref<8x37xf32, #tpu.memory_space<vmem>>, %arg4: memref<256x1024xf32, #tpu.memory_space<vmem>>, %arg5: memref<16x1024xf32, #tpu.memory_space<vmem>>, %arg6: memref<16x256xf32, #tpu.memory_space<vmem>>) attributes {dimension_semantics = [#tpu.dimension_semantics<parallel>, #tpu.dimension_semantics<arbitrary>], iteration_bounds = array<i64: 1, 1>, scalar_prefetch = 0 : i64, scratch_operands = 1 : i64, tpu.core_type = #tpu.core_type<tc>, window_params = [{transform_indices = @transform_0, window_bounds = array<i64: 2, 37, 256>}, {pipeline_mode = #tpu.pipeline_mode<synchronous>, transform_indices = @transform_1, window_bounds = array<i64: 8, 37>}, {transform_indices = @transform_2, window_bounds = array<i64: 256, 1024>}, {transform_indices = @transform_3, window_bounds = array<i64: 16, 1024>}]} {
    %c0_i32 = arith.constant 0 : i32
    %0 = arith.cmpi eq, %arg1, %c0_i32 : i32
    %1 = arith.extui %0 : i1 to i32
    %c0_i32_0 = arith.constant 0 : i32
    %2 = arith.cmpi ne, %1, %c0_i32_0 : i32
    scf.if %2 {
      %c0_6 = arith.constant 0 : index
      %c0_7 = arith.constant 0 : index
      %7 = vector.load %arg3[%c0_6, %c0_7] : memref<8x37xf32, #tpu.memory_space<vmem>>, vector<8x37xf32>
      %c0_8 = arith.constant 0 : index
      %c0_9 = arith.constant 0 : index
      %c0_10 = arith.constant 0 : index
      %8 = vector.load %arg2[%c0_8, %c0_9, %c0_10] : memref<2x37x256xf32, #tpu.memory_space<vmem>>, vector<1x37x256xf32>
      %9 = vector.shape_cast %8 : vector<1x37x256xf32> to vector<37x256xf32>
      %cst_11 = arith.constant dense<0.000000e+00> : vector<8x256xf32>
      %10 = tpu.matmul %7, %9, %cst_11 {dimension_numbers = #tpu.dot_dimension_numbers<[1], [0], [0], [1], [0, 0, 1, 1], [], []>} : vector<8x37xf32>, vector<37x256xf32>, vector<8x256xf32> -> vector<8x256xf32>
      %c0_12 = arith.constant 0 : index
      %c0_13 = arith.constant 0 : index
      %11 = vector.load %arg6[%c0_12, %c0_13] : memref<16x256xf32, #tpu.memory_space<vmem>>, vector<8x256xf32>
      tpu.vector_store %arg6[%c0_12, %c0_13], %10 {strides = array<i32>} : memref<16x256xf32, #tpu.memory_space<vmem>>, vector<8x256xf32>,
      %c1 = arith.constant 1 : index
      %c0_14 = arith.constant 0 : index
      %c0_15 = arith.constant 0 : index
      %12 = vector.load %arg2[%c1, %c0_14, %c0_15] : memref<2x37x256xf32, #tpu.memory_space<vmem>>, vector<1x37x256xf32>
      %13 = vector.shape_cast %12 : vector<1x37x256xf32> to vector<37x256xf32>
      %cst_16 = arith.constant dense<0.000000e+00> : vector<8x256xf32>
      %14 = tpu.matmul %7, %13, %cst_16 {dimension_numbers = #tpu.dot_dimension_numbers<[1], [0], [0], [1], [0, 0, 1, 1], [], []>} : vector<8x37xf32>, vector<37x256xf32>, vector<8x256xf32> -> vector<8x256xf32>
      %c8 = arith.constant 8 : index
      %c0_17 = arith.constant 0 : index
      %15 = vector.load %arg6[%c8, %c0_17] : memref<16x256xf32, #tpu.memory_space<vmem>>, vector<8x256xf32>
      tpu.vector_store %arg6[%c8, %c0_17], %14 {strides = array<i32>} : memref<16x256xf32, #tpu.memory_space<vmem>>, vector<8x256xf32>,
    } else {
    }
    %c0 = arith.constant 0 : index
    %c0_1 = arith.constant 0 : index
    %3 = vector.load %arg6[%c0, %c0_1] : memref<16x256xf32, #tpu.memory_space<vmem>>, vector<16x256xf32>
    %c0_2 = arith.constant 0 : index
    %c0_3 = arith.constant 0 : index
    %4 = vector.load %arg4[%c0_2, %c0_3] : memref<256x1024xf32, #tpu.memory_space<vmem>>, vector<256x1024xf32>
    %cst = arith.constant dense<0.000000e+00> : vector<16x1024xf32>
    %5 = tpu.matmul %3, %4, %cst {dimension_numbers = #tpu.dot_dimension_numbers<[1], [0], [0], [1], [0, 0, 1, 1], [], []>} : vector<16x256xf32>, vector<256x1024xf32>, vector<16x1024xf32> -> vector<16x1024xf32>
    %c0_4 = arith.constant 0 : index
    %c0_5 = arith.constant 0 : index
    %6 = vector.load %arg5[%c0_4, %c0_5] : memref<16x1024xf32, #tpu.memory_space<vmem>>, vector<16x1024xf32>
    tpu.vector_store %arg5[%c0_4, %c0_5], %5 {strides = array<i32>} : memref<16x1024xf32, #tpu.memory_space<vmem>>, vector<16x1024xf32>,
    return
  }
  func.func @transform_0(%arg0: i32, %arg1: i32) -> (i32, i32, i32) {
    %c0_i32 = arith.constant 0 : i32
    %c0_i32_0 = arith.constant 0 : i32
    %c0_i32_1 = arith.constant 0 : i32
    return %arg0, %c0_i32, %c0_i32_0 : i32, i32, i32
  }
  func.func @transform_1(%arg0: i32, %arg1: i32) -> (i32, i32) {
    %c0_i32 = arith.constant 0 : i32
    %c0_i32_0 = arith.constant 0 : i32
    %c0_i32_1 = arith.constant 0 : i32
    return %c0_i32, %c0_i32_0 : i32, i32
  }
  func.func @transform_2(%arg0: i32, %arg1: i32) -> (i32, i32) {
    %c0_i32 = arith.constant 0 : i32
    %c0_i32_0 = arith.constant 0 : i32
    return %c0_i32, %arg1 : i32, i32
  }
  func.func @transform_3(%arg0: i32, %arg1: i32) -> (i32, i32) {
    %c0_i32 = arith.constant 0 : i32
    return %arg0, %arg1 : i32, i32
  }
}

</mosaic_0001>

<llo_original>
// kernel: tpu_custom_call.1
$region0: #{tpu_custom_call.1}
  #allocation0 [shape = 'u32[]', space=smem, size = 0x4, offset = 0x4, fixed_abs, tag = 'smem constant byte address 0x4 - core index']
  #allocation1 [shape = 'u32[144,128]{1,0:T(1,128)}', space=vmem, size = 0x12000, scoped, tag = 'internal scratch']
  #allocation2 [shape = 'f32[16,256]{1,0:T(8,128)}', space=vmem, size = 0x4000, scoped, tag = 'scratch operand']
  %s0 = inlined_call_operand.vmem [shape: f32[2,37,256], index: 0, kind: input, shape index: {}]
  %s1 = inlined_call_operand.vmem [shape: f32[8,37], index: 1, kind: input, shape index: {}]
  %s2 = inlined_call_operand.hbm [shape: f32[256,1024], index: 2, kind: input, shape index: {}]
  %s3 = inlined_call_operand.hbm [shape: f32[16,1024], index: 3, kind: output, shape index: {}]
  %s4 = sld [smem:[#allocation0]]
  $region30: #{tpu_custom_call.1} parent=0
    _
  %s6 = ssub.s32 1, %s4
  %s7 = scalar_select 0, %s6, %s4
  $region1: #{tpu_custom_call.1} parent=0
    #allocation3 [shape = 'u8[1048576]{0}', space=vmem, size = 0x100000, scoped, tag = 'input window, operand 2, single buffered']
    #allocation4 [shape = 's32[1]{0}', space=sflag, size = 0x4, scoped, tag = 'scoped memory for tpu_custom_call.1']
    #allocation5 [shape = 's32[1]{0}', space=sflag, size = 0x4, scoped, tag = 'scoped memory for tpu_custom_call.1']
    #allocation6 [shape = 'u8[65536]{0}', space=vmem, size = 0x10000, scoped, tag = 'output window, operand 0, single buffered']
    %8 = vsyncpa [#allocation4], 0
    %9 = vsyncpa [#allocation5], 0
    // Predicated region
    $region2: #{tpu_custom_call.1} parent=1 // pred_check
      _
    $region3: #{tpu_custom_call.1} parent=1 // pred_check_branch
      %11 = sbr.rel (0) target = $region5
    $region4: #{tpu_custom_call.1} parent=1 // pred_region
      _
    $region5: #{tpu_custom_call.1} parent=1 // pred_fallthru
      _
    // Predicated region
    $region6: #{tpu_custom_call.1} parent=1 // pred_check
      _
    $region7: #{tpu_custom_call.1} parent=1 // pred_check_branch
      %13 = sbr.rel (0) target = $region9
    $region8: #{tpu_custom_call.1} parent=1 // pred_region
      _
    $region9: #{tpu_custom_call.1} parent=1 // pred_fallthru
      _
    // Predicated region
    $region10: #{tpu_custom_call.1} parent=1 // pred_check
      _
    $region11: #{tpu_custom_call.1} parent=1 // pred_check_branch
      %15 = sbr.rel (0) target = $region13
    $region12: #{tpu_custom_call.1} parent=1 // pred_region
      %s17 = ssub.s32 32768, 32768
      %18 = vsyncadd [#allocation4], %s17
      %s19 = sshll.u32 [#allocation3], 4
      %s20 = int_to_ptr.vmem [resolvable:$true] %s19
      %25 = dma.hbm_to_vmem [thread:$0]  %s2, 32768, %s20, [#allocation4], 1024, 1024, 64
    $region13: #{tpu_custom_call.1} parent=1 // pred_fallthru
      _
    // Predicated region
    $region14: #{tpu_custom_call.1} parent=1 // pred_check
      _
    $region15: #{tpu_custom_call.1} parent=1 // pred_check_branch
      %27 = sbr.rel (0) target = $region17
    $region16: #{tpu_custom_call.1} parent=1 // pred_region
      %28 = dma.done [#allocation4], 32768
    $region17: #{tpu_custom_call.1} parent=1 // pred_fallthru
      _
    %p29 = scmp.eq.s32.totalorder 0, 0
    // Predicated region
    $region18: #{tpu_custom_call.1} parent=1 // pred_check
      %p30 = pneg %p29
    $region19: #{tpu_custom_call.1} parent=1 // pred_check_branch
      %32 = sbr.rel (%p30) target = $region21
    $region20: #{tpu_custom_call.1} parent=1 // pred_region
      %v33 = vld [vmem:[%s1] sm:$0xff]
      %v34 = vld [vmem:[%s0] sm:$0xff]
      %v35 = vld [vmem:[%s0 + $0x8] sm:$0xff]
      %v36 = vld [vmem:[%s0 + $0x10] sm:$0xff]
      %v37 = vld [vmem:[%s0 + $0x18] sm:$0xff]
      %v38 = vld [vmem:[%s0 + $0x20] sm:$0xff]
      %v39 = vld [vmem:[%s0 + $0x28] sm:$0xff]
      %v40 = vld [vmem:[%s0 + $0x30] sm:$0xff]
      %v41 = vld [vmem:[%s0 + $0x38] sm:$0xff]
      %v42 = vld [vmem:[%s0 + $0x40] sm:$0x1f]
      %v43 = vld [vmem:[%s0 + $0x48] sm:$0x1f]
      %vm44 = vcmask 302080
      %v46 = vsel %vm44, %v33, 0
      %vm48 = vcmask 1044480
      %v50 = vsel %vm48, %v42, 0
      %v53 = vsel %vm48, %v43, 0
      %55 = vmatprep.subr.mxu0 0.0
      %56 = vmatpush1.msra.mxu0 0.0
      %57 = vmatprep.subr.mxu0 0.0
      %58 = vmatpush1.msra.mxu0 0.0
      %59 = vmatprep.subr.mxu0 0.0
      %60 = vmatpush1.msra.mxu0 0.0
      %61 = vmatprep.subr.mxu0 0.0
      %62 = vmatpush1.msra.mxu0 0.0
      %63 = vmatprep.subr.mxu0 0.0
      %64 = vmatpush1.msra.mxu0 0.0
      %65 = vmatprep.subr.mxu0 0.0
      %66 = vmatpush1.msra.mxu0 0.0
      %67 = vmatprep.subr.mxu0 0.0
      %68 = vmatpush1.msra.mxu0 0.0
      %69 = vmatprep.subr.mxu0 0.0
      %70 = vmatpush1.msra.mxu0 0.0
      %71 = vmatprep.subr.mxu0 0.0
      %72 = vmatpush1.msra.mxu0 0.0
      %73 = vmatprep.subr.mxu0 0.0
      %74 = vmatpush1.msra.mxu0 0.0
      %75 = vmatprep.subr.mxu0 0.0
      %76 = vmatpush1.msra.mxu0 0.0
      %77 = vmatprep.subr.mxu0 %v53
      %78 = vmatpush1.msra.mxu0 %v50
      %79 = vmatprep.subr.mxu0 %v41
      %80 = vmatpush1.msra.mxu0 %v40
      %81 = vmatprep.subr.mxu0 %v39
      %82 = vmatpush1.msra.mxu0 %v38
      %83 = vmatprep.subr.mxu0 %v37
      %84 = vmatpush1.msra.mxu0 %v36
      %85 = vmatprep.subr.mxu0 %v35
      %86 = vmatpush1.msra.mxu0 %v34
      %87 = vmatprep.subr.mxu0 0.0
      %88 = vmatpush2.msra.mxu0 0.0
      %89 = vmatprep.subr.mxu0 0.0
      %90 = vmatpush2.msra.mxu0 0.0
      %91 = vmatprep.subr.mxu0 0.0
      %92 = vmatpush2.msra.mxu0 0.0
      %93 = vmatprep.subr.mxu0 0.0
      %94 = vmatpush2.msra.mxu0 0.0
      %95 = vmatprep.subr.mxu0 0.0
      %96 = vmatpush2.msra.mxu0 0.0
      %97 = vmatprep.subr.mxu0 0.0
      %98 = vmatpush2.msra.mxu0 0.0
      %99 = vmatprep.subr.mxu0 0.0
      %100 = vmatpush2.msra.mxu0 0.0
      %101 = vmatprep.subr.mxu0 0.0
      %102 = vmatpush2.msra.mxu0 0.0
      %103 = vmatprep.subr.mxu0 0.0
      %104 = vmatpush2.msra.mxu0 0.0
      %105 = vmatprep.subr.mxu0 0.0
      %106 = vmatpush2.msra.mxu0 0.0
      %107 = vmatprep.subr.mxu0 0.0
      %108 = vmatpush2.msra.mxu0 0.0
      %109 = vmatprep.subr.mxu0 0.0
      %110 = vmatpush2.msra.mxu0 0.0
      %111 = vmatprep.subr.mxu0 0.0
      %112 = vmatpush2.msra.mxu0 0.0
      %113 = vmatprep.subr.mxu0 0.0
      %114 = vmatpush2.msra.mxu0 0.0
      %115 = vmatprep.subr.mxu0 0.0
      %116 = vmatpush2.msra.mxu0 0.0
      %117 = vmatprep.subr.mxu0 0.0
      %118 = vmatpush2.msra.mxu0 0.0
      %119 = vmatprep.mubr.f32.mxu0 0.0
      %120 = vmatmul.mubr.f32.gmra.mxu0 %v46
      %v121 = vpop.f32.mrf.mxu0
      %v122 = vadd.f32 0.0, %v121
      %v123 = vpop.f32.mrf.mxu0
      %v124 = vadd.f32 0.0, %v123
      %125 = vdwg.mxu0
      %126 = vst [vmem:[#allocation2] sm:$0xff] %v122
      %127 = vst [vmem:[#allocation2 + $0x8] sm:$0xff] %v124
      %s128 = scalar_lea.vmem %s0, 80
      %v129 = vld [vmem:[%s128] sm:$0xff]
      %v130 = vld [vmem:[%s128 + $0x8] sm:$0xff]
      %v131 = vld [vmem:[%s128 + $0x10] sm:$0xff]
      %v132 = vld [vmem:[%s128 + $0x18] sm:$0xff]
      %v133 = vld [vmem:[%s128 + $0x20] sm:$0xff]
      %v134 = vld [vmem:[%s128 + $0x28] sm:$0xff]
      %v135 = vld [vmem:[%s128 + $0x30] sm:$0xff]
      %v136 = vld [vmem:[%s128 + $0x38] sm:$0xff]
      %v137 = vld [vmem:[%s128 + $0x40] sm:$0x1f]
      %v138 = vld [vmem:[%s128 + $0x48] sm:$0x1f]
      %v140 = vsel %vm48, %v137, 0
      %v143 = vsel %vm48, %v138, 0
      %145 = vmatprep.subr.mxu0 0.0
      %146 = vmatpush1.msra.mxu0 0.0
      %147 = vmatprep.subr.mxu0 0.0
      %148 = vmatpush1.msra.mxu0 0.0
      %149 = vmatprep.subr.mxu0 0.0
      %150 = vmatpush1.msra.mxu0 0.0
      %151 = vmatprep.subr.mxu0 0.0
      %152 = vmatpush1.msra.mxu0 0.0
      %153 = vmatprep.subr.mxu0 0.0
      %154 = vmatpush1.msra.mxu0 0.0
      %155 = vmatprep.subr.mxu0 0.0
      %156 = vmatpush1.msra.mxu0 0.0
      %157 = vmatprep.subr.mxu0 0.0
      %158 = vmatpush1.msra.mxu0 0.0
      %159 = vmatprep.subr.mxu0 0.0
      %160 = vmatpush1.msra.mxu0 0.0
      %161 = vmatprep.subr.mxu0 0.0
      %162 = vmatpush1.msra.mxu0 0.0
      %163 = vmatprep.subr.mxu0 0.0
      %164 = vmatpush1.msra.mxu0 0.0
      %165 = vmatprep.subr.mxu0 0.0
      %166 = vmatpush1.msra.mxu0 0.0
      %167 = vmatprep.subr.mxu0 %v143
      %168 = vmatpush1.msra.mxu0 %v140
      %169 = vmatprep.subr.mxu0 %v136
      %170 = vmatpush1.msra.mxu0 %v135
      %171 = vmatprep.subr.mxu0 %v134
      %172 = vmatpush1.msra.mxu0 %v133
      %173 = vmatprep.subr.mxu0 %v132
      %174 = vmatpush1.msra.mxu0 %v131
      %175 = vmatprep.subr.mxu0 %v130
      %176 = vmatpush1.msra.mxu0 %v129
      %177 = vmatprep.subr.mxu0 0.0
      %178 = vmatpush2.msra.mxu0 0.0
      %179 = vmatprep.subr.mxu0 0.0
      %180 = vmatpush2.msra.mxu0 0.0
      %181 = vmatprep.subr.mxu0 0.0
      %182 = vmatpush2.msra.mxu0 0.0
      %183 = vmatprep.subr.mxu0 0.0
      %184 = vmatpush2.msra.mxu0 0.0
      %185 = vmatprep.subr.mxu0 0.0
      %186 = vmatpush2.msra.mxu0 0.0
      %187 = vmatprep.subr.mxu0 0.0
      %188 = vmatpush2.msra.mxu0 0.0
      %189 = vmatprep.subr.mxu0 0.0
      %190 = vmatpush2.msra.mxu0 0.0
      %191 = vmatprep.subr.mxu0 0.0
      %192 = vmatpush2.msra.mxu0 0.0
      %193 = vmatprep.subr.mxu0 0.0
      %194 = vmatpush2.msra.mxu0 0.0
      %195 = vmatprep.subr.mxu0 0.0
      %196 = vmatpush2.msra.mxu0 0.0
      %197 = vmatprep.subr.mxu0 0.0
      %198 = vmatpush2.msra.mxu0 0.0
      %199 = vmatprep.subr.mxu0 0.0
      %200 = vmatpush2.msra.mxu0 0.0
      %201 = vmatprep.subr.mxu0 0.0
      %202 = vmatpush2.msra.mxu0 0.0
      %203 = vmatprep.subr.mxu0 0.0
      %204 = vmatpush2.msra.mxu0 0.0
      %205 = vmatprep.subr.mxu0 0.0
      %206 = vmatpush2.msra.mxu0 0.0
      %207 = vmatprep.subr.mxu0 0.0
      %208 = vmatpush2.msra.mxu0 0.0
      %209 = vmatprep.mubr.f32.mxu0 0.0
      %210 = vmatmul.mubr.f32.gmra.mxu0 %v46
      %v211 = vpop.f32.mrf.mxu0
      %v212 = vadd.f32 0.0, %v211
      %v213 = vpop.f32.mrf.mxu0
      %v214 = vadd.f32 0.0, %v213
      %215 = vdwg.mxu0
      %216 = vst [vmem:[#allocation2 + $0x10] sm:$0xff] %v212
      %217 = vst [vmem:[#allocation2 + $0x18] sm:$0xff] %v214
    $region21: #{tpu_custom_call.1} parent=1 // pred_fallthru
      _
    %v218 = vld [vmem:[#allocation2] sm:$0xff]
    %v219 = vld [vmem:[#allocation2 + $0x8] sm:$0xff]
    %v220 = vld [vmem:[#allocation2 + $0x10] sm:$0xff]
    %v221 = vld [vmem:[#allocation2 + $0x18] sm:$0xff]
    %v222 = vld [vmem:[#allocation3] sm:$0xff]
    %v223 = vld [vmem:[#allocation3 + $0x8] sm:$0xff]
    %v224 = vld [vmem:[#allocation3 + $0x10] sm:$0xff]
    %v225 = vld [vmem:[#allocation3 + $0x18] sm:$0xff]
    %v226 = vld [vmem:[#allocation3 + $0x20] sm:$0xff]
    %v227 = vld [vmem:[#allocation3 + $0x28] sm:$0xff]
    %v228 = vld [vmem:[#allocation3 + $0x30] sm:$0xff]
    %v229 = vld [vmem:[#allocation3 + $0x38] sm:$0xff]
    %v230 = vld [vmem:[#allocation3 + $0x40] sm:$0xff]
    %v231 = vld [vmem:[#allocation3 + $0x48] sm:$0xff]
    %v232 = vld [vmem:[#allocation3 + $0x50] sm:$0xff]
    %v233 = vld [vmem:[#allocation3 + $0x58] sm:$0xff]
    %v234 = vld [vmem:[#allocation3 + $0x60] sm:$0xff]
    %v235 = vld [vmem:[#allocation3 + $0x68] sm:$0xff]
    %v236 = vld [vmem:[#allocation3 + $0x70] sm:$0xff]
    %v237 = vld [vmem:[#allocation3 + $0x78] sm:$0xff]
    %v238 = vld [vmem:[#allocation3 + $0x80] sm:$0xff]
    %v239 = vld [vmem:[#allocation3 + $0x88] sm:$0xff]
    %v240 = vld [vmem:[#allocation3 + $0x90] sm:$0xff]
    %v241 = vld [vmem:[#allocation3 + $0x98] sm:$0xff]
    %v242 = vld [vmem:[#allocation3 + $0xa0] sm:$0xff]
    %v243 = vld [vmem:[#allocation3 + $0xa8] sm:$0xff]
    %v244 = vld [vmem:[#allocation3 + $0xb0] sm:$0xff]
    %v245 = vld [vmem:[#allocation3 + $0xb8] sm:$0xff]
    %v246 = vld [vmem:[#allocation3 + $0xc0] sm:$0xff]
    %v247 = vld [vmem:[#allocation3 + $0xc8] sm:$0xff]
    %v248 = vld [vmem:[#allocation3 + $0xd0] sm:$0xff]
    %v249 = vld [vmem:[#allocation3 + $0xd8] sm:$0xff]
    %v250 = vld [vmem:[#allocation3 + $0xe0] sm:$0xff]
    %v251 = vld [vmem:[#allocation3 + $0xe8] sm:$0xff]
    %v252 = vld [vmem:[#allocation3 + $0xf0] sm:$0xff]
    %v253 = vld [vmem:[#allocation3 + $0xf8] sm:$0xff]
    %v254 = vld [vmem:[#allocation3 + $0x100] sm:$0xff]
    %v255 = vld [vmem:[#allocation3 + $0x108] sm:$0xff]
    %v256 = vld [vmem:[#allocation3 + $0x110] sm:$0xff]
    %v257 = vld [vmem:[#allocation3 + $0x118] sm:$0xff]
    %v258 = vld [vmem:[#allocation3 + $0x120] sm:$0xff]
    %v259 = vld [vmem:[#allocation3 + $0x128] sm:$0xff]
    %v260 = vld [vmem:[#allocation3 + $0x130] sm:$0xff]
    %v261 = vld [vmem:[#allocation3 + $0x138] sm:$0xff]
    %v262 = vld [vmem:[#allocation3 + $0x140] sm:$0xff]
    %v263 = vld [vmem:[#allocation3 + $0x148] sm:$0xff]
    %v264 = vld [vmem:[#allocation3 + $0x150] sm:$0xff]
    %v265 = vld [vmem:[#allocation3 + $0x158] sm:$0xff]
    %v266 = vld [vmem:[#allocation3 + $0x160] sm:$0xff]
    %v267 = vld [vmem:[#allocation3 + $0x168] sm:$0xff]
    %v268 = vld [vmem:[#allocation3 + $0x170] sm:$0xff]
    %v269 = vld [vmem:[#allocation3 + $0x178] sm:$0xff]
    %v270 = vld [vmem:[#allocation3 + $0x180] sm:$0xff]
    %v271 = vld [vmem:[#allocation3 + $0x188] sm:$0xff]
    %v272 = vld [vmem:[#allocation3 + $0x190] sm:$0xff]
    %v273 = vld [vmem:[#allocation3 + $0x198] sm:$0xff]
    %v274 = vld [vmem:[#allocation3 + $0x1a0] sm:$0xff]
    %v275 = vld [vmem:[#allocation3 + $0x1a8] sm:$0xff]
    %v276 = vld [vmem:[#allocation3 + $0x1b0] sm:$0xff]
    %v277 = vld [vmem:[#allocation3 + $0x1b8] sm:$0xff]
    %v278 = vld [vmem:[#allocation3 + $0x1c0] sm:$0xff]
    %v279 = vld [vmem:[#allocation3 + $0x1c8] sm:$0xff]
    %v280 = vld [vmem:[#allocation3 + $0x1d0] sm:$0xff]
    %v281 = vld [vmem:[#allocation3 + $0x1d8] sm:$0xff]
    %v282 = vld [vmem:[#allocation3 + $0x1e0] sm:$0xff]
    %v283 = vld [vmem:[#allocation3 + $0x1e8] sm:$0xff]
    %v284 = vld [vmem:[#allocation3 + $0x1f0] sm:$0xff]
    %v285 = vld [vmem:[#allocation3 + $0x1f8] sm:$0xff]
    %v286 = vld [vmem:[#allocation3 + $0x200] sm:$0xff]
    %v287 = vld [vmem:[#allocation3 + $0x208] sm:$0xff]
    %v288 = vld [vmem:[#allocation3 + $0x210] sm:$0xff]
    %v289 = vld [vmem:[#allocation3 + $0x218] sm:$0xff]
    %v290 = vld [vmem:[#allocation3 + $0x220] sm:$0xff]
    %v291 = vld [vmem:[#allocation3 + $0x228] sm:$0xff]
    %v292 = vld [vmem:[#allocation3 + $0x230] sm:$0xff]
    %v293 = vld [vmem:[#allocation3 + $0x238] sm:$0xff]
    %v294 = vld [vmem:[#allocation3 + $0x240] sm:$0xff]
    %v295 = vld [vmem:[#allocation3 + $0x248] sm:$0xff]
    %v296 = vld [vmem:[#allocation3 + $0x250] sm:$0xff]
    %v297 = vld [vmem:[#allocation3 + $0x258] sm:$0xff]
    %v298 = vld [vmem:[#allocation3 + $0x260] sm:$0xff]
    %v299 = vld [vmem:[#allocation3 + $0x268] sm:$0xff]
    %v300 = vld [vmem:[#allocation3 + $0x270] sm:$0xff]
    %v301 = vld [vmem:[#allocation3 + $0x278] sm:$0xff]
    %v302 = vld [vmem:[#allocation3 + $0x280] sm:$0xff]
    %v303 = vld [vmem:[#allocation3 + $0x288] sm:$0xff]
    %v304 = vld [vmem:[#allocation3 + $0x290] sm:$0xff]
    %v305 = vld [vmem:[#allocation3 + $0x298] sm:$0xff]
    %v306 = vld [vmem:[#allocation3 + $0x2a0] sm:$0xff]
    %v307 = vld [vmem:[#allocation3 + $0x2a8] sm:$0xff]
    %v308 = vld [vmem:[#allocation3 + $0x2b0] sm:$0xff]
    %v309 = vld [vmem:[#allocation3 + $0x2b8] sm:$0xff]
    %v310 = vld [vmem:[#allocation3 + $0x2c0] sm:$0xff]
    %v311 = vld [vmem:[#allocation3 + $0x2c8] sm:$0xff]
    %v312 = vld [vmem:[#allocation3 + $0x2d0] sm:$0xff]
    %v313 = vld [vmem:[#allocation3 + $0x2d8] sm:$0xff]
    %v314 = vld [vmem:[#allocation3 + $0x2e0] sm:$0xff]
    %v315 = vld [vmem:[#allocation3 + $0x2e8] sm:$0xff]
    %v316 = vld [vmem:[#allocation3 + $0x2f0] sm:$0xff]
    %v317 = vld [vmem:[#allocation3 + $0x2f8] sm:$0xff]
    %v318 = vld [vmem:[#allocation3 + $0x300] sm:$0xff]
    %v319 = vld [vmem:[#allocation3 + $0x308] sm:$0xff]
    %v320 = vld [vmem:[#allocation3 + $0x310] sm:$0xff]
    %v321 = vld [vmem:[#allocation3 + $0x318] sm:$0xff]
    %v322 = vld [vmem:[#allocation3 + $0x320] sm:$0xff]
    %v323 = vld [vmem:[#allocation3 + $0x328] sm:$0xff]
    %v324 = vld [vmem:[#allocation3 + $0x330] sm:$0xff]
    %v325 = vld [vmem:[#allocation3 + $0x338] sm:$0xff]
    %v326 = vld [vmem:[#allocation3 + $0x340] sm:$0xff]
    %v327 = vld [vmem:[#allocation3 + $0x348] sm:$0xff]
    %v328 = vld [vmem:[#allocation3 + $0x350] sm:$0xff]
    %v329 = vld [vmem:[#allocation3 + $0x358] sm:$0xff]
    %v330 = vld [vmem:[#allocation3 + $0x360] sm:$0xff]
    %v331 = vld [vmem:[#allocation3 + $0x368] sm:$0xff]
    %v332 = vld [vmem:[#allocation3 + $0x370] sm:$0xff]
    %v333 = vld [vmem:[#allocation3 + $0x378] sm:$0xff]
    %v334 = vld [vmem:[#allocation3 + $0x380] sm:$0xff]
    %v335 = vld [vmem:[#allocation3 + $0x388] sm:$0xff]
    %v336 = vld [vmem:[#allocation3 + $0x390] sm:$0xff]
    %v337 = vld [vmem:[#allocation3 + $0x398] sm:$0xff]
    %v338 = vld [vmem:[#allocation3 + $0x3a0] sm:$0xff]
    %v339 = vld [vmem:[#allocation3 + $0x3a8] sm:$0xff]
    %v340 = vld [vmem:[#allocation3 + $0x3b0] sm:$0xff]
    %v341 = vld [vmem:[#allocation3 + $0x3b8] sm:$0xff]
    %v342 = vld [vmem:[#allocation3 + $0x3c0] sm:$0xff]
    %v343 = vld [vmem:[#allocation3 + $0x3c8] sm:$0xff]
    %v344 = vld [vmem:[#allocation3 + $0x3d0] sm:$0xff]
    %v345 = vld [vmem:[#allocation3 + $0x3d8] sm:$0xff]
    %v346 = vld [vmem:[#allocation3 + $0x3e0] sm:$0xff]
    %v347 = vld [vmem:[#allocation3 + $0x3e8] sm:$0xff]
    %v348 = vld [vmem:[#allocation3 + $0x3f0] sm:$0xff]
    %v349 = vld [vmem:[#allocation3 + $0x3f8] sm:$0xff]
    %v350 = vld [vmem:[#allocation3 + $0x400] sm:$0xff]
    %v351 = vld [vmem:[#allocation3 + $0x408] sm:$0xff]
    %v352 = vld [vmem:[#allocation3 + $0x410] sm:$0xff]
    %v353 = vld [vmem:[#allocation3 + $0x418] sm:$0xff]
    %v354 = vld [vmem:[#allocation3 + $0x420] sm:$0xff]
    %v355 = vld [vmem:[#allocation3 + $0x428] sm:$0xff]
    %v356 = vld [vmem:[#allocation3 + $0x430] sm:$0xff]
    %v357 = vld [vmem:[#allocation3 + $0x438] sm:$0xff]
    %v358 = vld [vmem:[#allocation3 + $0x440] sm:$0xff]
    %v359 = vld [vmem:[#allocation3 + $0x448] sm:$0xff]
    %v360 = vld [vmem:[#allocation3 + $0x450] sm:$0xff]
    %v361 = vld [vmem:[#allocation3 + $0x458] sm:$0xff]
    %v362 = vld [vmem:[#allocation3 + $0x460] sm:$0xff]
    %v363 = vld [vmem:[#allocation3 + $0x468] sm:$0xff]
    %v364 = vld [vmem:[#allocation3 + $0x470] sm:$0xff]
    %v365 = vld [vmem:[#allocation3 + $0x478] sm:$0xff]
    %v366 = vld [vmem:[#allocation3 + $0x480] sm:$0xff]
    %v367 = vld [vmem:[#allocation3 + $0x488] sm:$0xff]
    %v368 = vld [vmem:[#allocation3 + $0x490] sm:$0xff]
    %v369 = vld [vmem:[#allocation3 + $0x498] sm:$0xff]
    %v370 = vld [vmem:[#allocation3 + $0x4a0] sm:$0xff]
    %v371 = vld [vmem:[#allocation3 + $0x4a8] sm:$0xff]
    %v372 = vld [vmem:[#allocation3 + $0x4b0] sm:$0xff]
    %v373 = vld [vmem:[#allocation3 + $0x4b8] sm:$0xff]
    %v374 = vld [vmem:[#allocation3 + $0x4c0] sm:$0xff]
    %v375 = vld [vmem:[#allocation3 + $0x4c8] sm:$0xff]
    %v376 = vld [vmem:[#allocation3 + $0x4d0] sm:$0xff]
    %v377 = vld [vmem:[#allocation3 + $0x4d8] sm:$0xff]
    %v378 = vld [vmem:[#allocation3 + $0x4e0] sm:$0xff]
    %v379 = vld [vmem:[#allocation3 + $0x4e8] sm:$0xff]
    %v380 = vld [vmem:[#allocation3 + $0x4f0] sm:$0xff]
    %v381 = vld [vmem:[#allocation3 + $0x4f8] sm:$0xff]
    %v382 = vld [vmem:[#allocation3 + $0x500] sm:$0xff]
    %v383 = vld [vmem:[#allocation3 + $0x508] sm:$0xff]
    %v384 = vld [vmem:[#allocation3 + $0x510] sm:$0xff]
    %v385 = vld [vmem:[#allocation3 + $0x518] sm:$0xff]
    %v386 = vld [vmem:[#allocation3 + $0x520] sm:$0xff]
    %v387 = vld [vmem:[#allocation3 + $0x528] sm:$0xff]
    %v388 = vld [vmem:[#allocation3 + $0x530] sm:$0xff]
    %v389 = vld [vmem:[#allocation3 + $0x538] sm:$0xff]
    %v390 = vld [vmem:[#allocation3 + $0x540] sm:$0xff]
    %v391 = vld [vmem:[#allocation3 + $0x548] sm:$0xff]
    %v392 = vld [vmem:[#allocation3 + $0x550] sm:$0xff]
    %v393 = vld [vmem:[#allocation3 + $0x558] sm:$0xff]
    %v394 = vld [vmem:[#allocation3 + $0x560] sm:$0xff]
    %v395 = vld [vmem:[#allocation3 + $0x568] sm:$0xff]
    %v396 = vld [vmem:[#allocation3 + $0x570] sm:$0xff]
    %v397 = vld [vmem:[#allocation3 + $0x578] sm:$0xff]
    %v398 = vld [vmem:[#allocation3 + $0x580] sm:$0xff]
    %v399 = vld [vmem:[#allocation3 + $0x588] sm:$0xff]
    %v400 = vld [vmem:[#allocation3 + $0x590] sm:$0xff]
    %v401 = vld [vmem:[#allocation3 + $0x598] sm:$0xff]
    %v402 = vld [vmem:[#allocation3 + $0x5a0] sm:$0xff]
    %v403 = vld [vmem:[#allocation3 + $0x5a8] sm:$0xff]
    %v404 = vld [vmem:[#allocation3 + $0x5b0] sm:$0xff]
    %v405 = vld [vmem:[#allocation3 + $0x5b8] sm:$0xff]
    %v406 = vld [vmem:[#allocation3 + $0x5c0] sm:$0xff]
    %v407 = vld [vmem:[#allocation3 + $0x5c8] sm:$0xff]
    %v408 = vld [vmem:[#allocation3 + $0x5d0] sm:$0xff]
    %v409 = vld [vmem:[#allocation3 + $0x5d8] sm:$0xff]
    %v410 = vld [vmem:[#allocation3 + $0x5e0] sm:$0xff]
    %v411 = vld [vmem:[#allocation3 + $0x5e8] sm:$0xff]
    %v412 = vld [vmem:[#allocation3 + $0x5f0] sm:$0xff]
    %v413 = vld [vmem:[#allocation3 + $0x5f8] sm:$0xff]
    %v414 = vld [vmem:[#allocation3 + $0x600] sm:$0xff]
    %v415 = vld [vmem:[#allocation3 + $0x608] sm:$0xff]
    %v416 = vld [vmem:[#allocation3 + $0x610] sm:$0xff]
    %v417 = vld [vmem:[#allocation3 + $0x618] sm:$0xff]
    %v418 = vld [vmem:[#allocation3 + $0x620] sm:$0xff]
    %v419 = vld [vmem:[#allocation3 + $0x628] sm:$0xff]
    %v420 = vld [vmem:[#allocation3 + $0x630] sm:$0xff]
    %v421 = vld [vmem:[#allocation3 + $0x638] sm:$0xff]
    %v422 = vld [vmem:[#allocation3 + $0x640] sm:$0xff]
    %v423 = vld [vmem:[#allocation3 + $0x648] sm:$0xff]
    %v424 = vld [vmem:[#allocation3 + $0x650] sm:$0xff]
    %v425 = vld [vmem:[#allocation3 + $0x658] sm:$0xff]
    %v426 = vld [vmem:[#allocation3 + $0x660] sm:$0xff]
    %v427 = vld [vmem:[#allocation3 + $0x668] sm:$0xff]
    %v428 = vld [vmem:[#allocation3 + $0x670] sm:$0xff]
    %v429 = vld [vmem:[#allocation3 + $0x678] sm:$0xff]
    %v430 = vld [vmem:[#allocation3 + $0x680] sm:$0xff]
    %v431 = vld [vmem:[#allocation3 + $0x688] sm:$0xff]
    %v432 = vld [vmem:[#allocation3 + $0x690] sm:$0xff]
    %v433 = vld [vmem:[#allocation3 + $0x698] sm:$0xff]
    %v434 = vld [vmem:[#allocation3 + $0x6a0] sm:$0xff]
    %v435 = vld [vmem:[#allocation3 + $0x6a8] sm:$0xff]
    %v436 = vld [vmem:[#allocation3 + $0x6b0] sm:$0xff]
    %v437 = vld [vmem:[#allocation3 + $0x6b8] sm:$0xff]
    %v438 = vld [vmem:[#allocation3 + $0x6c0] sm:$0xff]
    %v439 = vld [vmem:[#allocation3 + $0x6c8] sm:$0xff]
    %v440 = vld [vmem:[#allocation3 + $0x6d0] sm:$0xff]
    %v441 = vld [vmem:[#allocation3 + $0x6d8] sm:$0xff]
    %v442 = vld [vmem:[#allocation3 + $0x6e0] sm:$0xff]
    %v443 = vld [vmem:[#allocation3 + $0x6e8] sm:$0xff]
    %v444 = vld [vmem:[#allocation3 + $0x6f0] sm:$0xff]
    %v445 = vld [vmem:[#allocation3 + $0x6f8] sm:$0xff]
    %v446 = vld [vmem:[#allocation3 + $0x700] sm:$0xff]
    %v447 = vld [vmem:[#allocation3 + $0x708] sm:$0xff]
    %v448 = vld [vmem:[#allocation3 + $0x710] sm:$0xff]
    %v449 = vld [vmem:[#allocation3 + $0x718] sm:$0xff]
    %v450 = vld [vmem:[#allocation3 + $0x720] sm:$0xff]
    %v451 = vld [vmem:[#allocation3 + $0x728] sm:$0xff]
    %v452 = vld [vmem:[#allocation3 + $0x730] sm:$0xff]
    %v453 = vld [vmem:[#allocation3 + $0x738] sm:$0xff]
    %v454 = vld [vmem:[#allocation3 + $0x740] sm:$0xff]
    %v455 = vld [vmem:[#allocation3 + $0x748] sm:$0xff]
    %v456 = vld [vmem:[#allocation3 + $0x750] sm:$0xff]
    %v457 = vld [vmem:[#allocation3 + $0x758] sm:$0xff]
    %v458 = vld [vmem:[#allocation3 + $0x760] sm:$0xff]
    %v459 = vld [vmem:[#allocation3 + $0x768] sm:$0xff]
    %v460 = vld [vmem:[#allocation3 + $0x770] sm:$0xff]
    %v461 = vld [vmem:[#allocation3 + $0x778] sm:$0xff]
    %v462 = vld [vmem:[#allocation3 + $0x780] sm:$0xff]
    %v463 = vld [vmem:[#allocation3 + $0x788] sm:$0xff]
    %v464 = vld [vmem:[#allocation3 + $0x790] sm:$0xff]
    %v465 = vld [vmem:[#allocation3 + $0x798] sm:$0xff]
    %v466 = vld [vmem:[#allocation3 + $0x7a0] sm:$0xff]
    %v467 = vld [vmem:[#allocation3 + $0x7a8] sm:$0xff]
    %v468 = vld [vmem:[#allocation3 + $0x7b0] sm:$0xff]
    %v469 = vld [vmem:[#allocation3 + $0x7b8] sm:$0xff]
    %v470 = vld [vmem:[#allocation3 + $0x7c0] sm:$0xff]
    %v471 = vld [vmem:[#allocation3 + $0x7c8] sm:$0xff]
    %v472 = vld [vmem:[#allocation3 + $0x7d0] sm:$0xff]
    %v473 = vld [vmem:[#allocation3 + $0x7d8] sm:$0xff]
    %v474 = vld [vmem:[#allocation3 + $0x7e0] sm:$0xff]
    %v475 = vld [vmem:[#allocation3 + $0x7e8] sm:$0xff]
    %v476 = vld [vmem:[#allocation3 + $0x7f0] sm:$0xff]
    %v477 = vld [vmem:[#allocation3 + $0x7f8] sm:$0xff]
    %478 = vmatprep.subr.mxu0 %v343
    %479 = vmatpush1.msra.mxu0 %v342
    %480 = vmatprep.subr.mxu0 %v335
    %481 = vmatpush1.msra.mxu0 %v334
    %482 = vmatprep.subr.mxu0 %v327
    %483 = vmatpush1.msra.mxu0 %v326
    %484 = vmatprep.subr.mxu0 %v319
    %485 = vmatpush1.msra.mxu0 %v318
    %486 = vmatprep.subr.mxu0 %v311
    %487 = vmatpush1.msra.mxu0 %v310
    %488 = vmatprep.subr.mxu0 %v303
    %489 = vmatpush1.msra.mxu0 %v302
    %490 = vmatprep.subr.mxu0 %v295
    %491 = vmatpush1.msra.mxu0 %v294
    %492 = vmatprep.subr.mxu0 %v287
    %493 = vmatpush1.msra.mxu0 %v286
    %494 = vmatprep.subr.mxu0 %v279
    %495 = vmatpush1.msra.mxu0 %v278
    %496 = vmatprep.subr.mxu0 %v271
    %497 = vmatpush1.msra.mxu0 %v270
    %498 = vmatprep.subr.mxu0 %v263
    %499 = vmatpush1.msra.mxu0 %v262
    %500 = vmatprep.subr.mxu0 %v255
    %501 = vmatpush1.msra.mxu0 %v254
    %502 = vmatprep.subr.mxu0 %v247
    %503 = vmatpush1.msra.mxu0 %v246
    %504 = vmatprep.subr.mxu0 %v239
    %505 = vmatpush1.msra.mxu0 %v238
    %506 = vmatprep.subr.mxu0 %v231
    %507 = vmatpush1.msra.mxu0 %v230
    %508 = vmatprep.subr.mxu0 %v223
    %509 = vmatpush1.msra.mxu0 %v222
    %510 = vmatprep.subr.mxu0 %v471
    %511 = vmatpush2.msra.mxu0 %v470
    %512 = vmatprep.subr.mxu0 %v463
    %513 = vmatpush2.msra.mxu0 %v462
    %514 = vmatprep.subr.mxu0 %v455
    %515 = vmatpush2.msra.mxu0 %v454
    %516 = vmatprep.subr.mxu0 %v447
    %517 = vmatpush2.msra.mxu0 %v446
    %518 = vmatprep.subr.mxu0 %v439
    %519 = vmatpush2.msra.mxu0 %v438
    %520 = vmatprep.subr.mxu0 %v431
    %521 = vmatpush2.msra.mxu0 %v430
    %522 = vmatprep.subr.mxu0 %v423
    %523 = vmatpush2.msra.mxu0 %v422
    %524 = vmatprep.subr.mxu0 %v415
    %525 = vmatpush2.msra.mxu0 %v414
    %526 = vmatprep.subr.mxu0 %v407
    %527 = vmatpush2.msra.mxu0 %v406
    %528 = vmatprep.subr.mxu0 %v399
    %529 = vmatpush2.msra.mxu0 %v398
    %530 = vmatprep.subr.mxu0 %v391
    %531 = vmatpush2.msra.mxu0 %v390
    %532 = vmatprep.subr.mxu0 %v383
    %533 = vmatpush2.msra.mxu0 %v382
    %534 = vmatprep.subr.mxu0 %v375
    %535 = vmatpush2.msra.mxu0 %v374
    %536 = vmatprep.subr.mxu0 %v367
    %537 = vmatpush2.msra.mxu0 %v366
    %538 = vmatprep.subr.mxu0 %v359
    %539 = vmatpush2.msra.mxu0 %v358
    %540 = vmatprep.subr.mxu0 %v351
    %541 = vmatpush2.msra.mxu0 %v350
    %542 = vmatprep.mubr.f32.mxu0 %v219
    %543 = vmatmul.mubr.f32.gmra.mxu0 %v218
    %v544 = vpop.f32.mrf.mxu0
    %v545 = vadd.f32 0.0, %v544
    %v546 = vpop.f32.mrf.mxu0
    %v547 = vadd.f32 0.0, %v546
    %548 = vmatprep.mubr.f32.mxu0 %v221
    %549 = vmatmul.mubr.f32.gmra.mxu0 %v220
    %v550 = vpop.f32.mrf.mxu0
    %v551 = vadd.f32 0.0, %v550
    %v552 = vpop.f32.mrf.mxu0
    %v553 = vadd.f32 0.0, %v552
    %554 = vdwg.mxu0
    %555 = vmatprep.subr.mxu0 %v345
    %556 = vmatpush1.msra.mxu0 %v344
    %557 = vmatprep.subr.mxu0 %v337
    %558 = vmatpush1.msra.mxu0 %v336
    %559 = vmatprep.subr.mxu0 %v329
    %560 = vmatpush1.msra.mxu0 %v328
    %561 = vmatprep.subr.mxu0 %v321
    %562 = vmatpush1.msra.mxu0 %v320
    %563 = vmatprep.subr.mxu0 %v313
    %564 = vmatpush1.msra.mxu0 %v312
    %565 = vmatprep.subr.mxu0 %v305
    %566 = vmatpush1.msra.mxu0 %v304
    %567 = vmatprep.subr.mxu0 %v297
    %568 = vmatpush1.msra.mxu0 %v296
    %569 = vmatprep.subr.mxu0 %v289
    %570 = vmatpush1.msra.mxu0 %v288
    %571 = vmatprep.subr.mxu0 %v281
    %572 = vmatpush1.msra.mxu0 %v280
    %573 = vmatprep.subr.mxu0 %v273
    %574 = vmatpush1.msra.mxu0 %v272
    %575 = vmatprep.subr.mxu0 %v265
    %576 = vmatpush1.msra.mxu0 %v264
    %577 = vmatprep.subr.mxu0 %v257
    %578 = vmatpush1.msra.mxu0 %v256
    %579 = vmatprep.subr.mxu0 %v249
    %580 = vmatpush1.msra.mxu0 %v248
    %581 = vmatprep.subr.mxu0 %v241
    %582 = vmatpush1.msra.mxu0 %v240
    %583 = vmatprep.subr.mxu0 %v233
    %584 = vmatpush1.msra.mxu0 %v232
    %585 = vmatprep.subr.mxu0 %v225
    %586 = vmatpush1.msra.mxu0 %v224
    %587 = vmatprep.subr.mxu0 %v473
    %588 = vmatpush2.msra.mxu0 %v472
    %589 = vmatprep.subr.mxu0 %v465
    %590 = vmatpush2.msra.mxu0 %v464
    %591 = vmatprep.subr.mxu0 %v457
    %592 = vmatpush2.msra.mxu0 %v456
    %593 = vmatprep.subr.mxu0 %v449
    %594 = vmatpush2.msra.mxu0 %v448
    %595 = vmatprep.subr.mxu0 %v441
    %596 = vmatpush2.msra.mxu0 %v440
    %597 = vmatprep.subr.mxu0 %v433
    %598 = vmatpush2.msra.mxu0 %v432
    %599 = vmatprep.subr.mxu0 %v425
    %600 = vmatpush2.msra.mxu0 %v424
    %601 = vmatprep.subr.mxu0 %v417
    %602 = vmatpush2.msra.mxu0 %v416
    %603 = vmatprep.subr.mxu0 %v409
    %604 = vmatpush2.msra.mxu0 %v408
    %605 = vmatprep.subr.mxu0 %v401
    %606 = vmatpush2.msra.mxu0 %v400
    %607 = vmatprep.subr.mxu0 %v393
    %608 = vmatpush2.msra.mxu0 %v392
    %609 = vmatprep.subr.mxu0 %v385
    %610 = vmatpush2.msra.mxu0 %v384
    %611 = vmatprep.subr.mxu0 %v377
    %612 = vmatpush2.msra.mxu0 %v376
    %613 = vmatprep.subr.mxu0 %v369
    %614 = vmatpush2.msra.mxu0 %v368
    %615 = vmatprep.subr.mxu0 %v361
    %616 = vmatpush2.msra.mxu0 %v360
    %617 = vmatprep.subr.mxu0 %v353
    %618 = vmatpush2.msra.mxu0 %v352
    %619 = vmatprep.mubr.f32.mxu0 %v219
    %620 = vmatmul.mubr.f32.gmra.mxu0 %v218
    %v621 = vpop.f32.mrf.mxu0
    %v622 = vadd.f32 0.0, %v621
    %v623 = vpop.f32.mrf.mxu0
    %v624 = vadd.f32 0.0, %v623
    %625 = vmatprep.mubr.f32.mxu0 %v221
    %626 = vmatmul.mubr.f32.gmra.mxu0 %v220
    %v627 = vpop.f32.mrf.mxu0
    %v628 = vadd.f32 0.0, %v627
    %v629 = vpop.f32.mrf.mxu0
    %v630 = vadd.f32 0.0, %v629
    %631 = vdwg.mxu0
    %632 = vmatprep.subr.mxu0 %v347
    %633 = vmatpush1.msra.mxu0 %v346
    %634 = vmatprep.subr.mxu0 %v339
    %635 = vmatpush1.msra.mxu0 %v338
    %636 = vmatprep.subr.mxu0 %v331
    %637 = vmatpush1.msra.mxu0 %v330
    %638 = vmatprep.subr.mxu0 %v323
    %639 = vmatpush1.msra.mxu0 %v322
    %640 = vmatprep.subr.mxu0 %v315
    %641 = vmatpush1.msra.mxu0 %v314
    %642 = vmatprep.subr.mxu0 %v307
    %643 = vmatpush1.msra.mxu0 %v306
    %644 = vmatprep.subr.mxu0 %v299
    %645 = vmatpush1.msra.mxu0 %v298
    %646 = vmatprep.subr.mxu0 %v291
    %647 = vmatpush1.msra.mxu0 %v290
    %648 = vmatprep.subr.mxu0 %v283
    %649 = vmatpush1.msra.mxu0 %v282
    %650 = vmatprep.subr.mxu0 %v275
    %651 = vmatpush1.msra.mxu0 %v274
    %652 = vmatprep.subr.mxu0 %v267
    %653 = vmatpush1.msra.mxu0 %v266
    %654 = vmatprep.subr.mxu0 %v259
    %655 = vmatpush1.msra.mxu0 %v258
    %656 = vmatprep.subr.mxu0 %v251
    %657 = vmatpush1.msra.mxu0 %v250
    %658 = vmatprep.subr.mxu0 %v243
    %659 = vmatpush1.msra.mxu0 %v242
    %660 = vmatprep.subr.mxu0 %v235
    %661 = vmatpush1.msra.mxu0 %v234
    %662 = vmatprep.subr.mxu0 %v227
    %663 = vmatpush1.msra.mxu0 %v226
    %664 = vmatprep.subr.mxu0 %v475
    %665 = vmatpush2.msra.mxu0 %v474
    %666 = vmatprep.subr.mxu0 %v467
    %667 = vmatpush2.msra.mxu0 %v466
    %668 = vmatprep.subr.mxu0 %v459
    %669 = vmatpush2.msra.mxu0 %v458
    %670 = vmatprep.subr.mxu0 %v451
    %671 = vmatpush2.msra.mxu0 %v450
    %672 = vmatprep.subr.mxu0 %v443
    %673 = vmatpush2.msra.mxu0 %v442
    %674 = vmatprep.subr.mxu0 %v435
    %675 = vmatpush2.msra.mxu0 %v434
    %676 = vmatprep.subr.mxu0 %v427
    %677 = vmatpush2.msra.mxu0 %v426
    %678 = vmatprep.subr.mxu0 %v419
    %679 = vmatpush2.msra.mxu0 %v418
    %680 = vmatprep.subr.mxu0 %v411
    %681 = vmatpush2.msra.mxu0 %v410
    %682 = vmatprep.subr.mxu0 %v403
    %683 = vmatpush2.msra.mxu0 %v402
    %684 = vmatprep.subr.mxu0 %v395
    %685 = vmatpush2.msra.mxu0 %v394
    %686 = vmatprep.subr.mxu0 %v387
    %687 = vmatpush2.msra.mxu0 %v386
    %688 = vmatprep.subr.mxu0 %v379
    %689 = vmatpush2.msra.mxu0 %v378
    %690 = vmatprep.subr.mxu0 %v371
    %691 = vmatpush2.msra.mxu0 %v370
    %692 = vmatprep.subr.mxu0 %v363
    %693 = vmatpush2.msra.mxu0 %v362
    %694 = vmatprep.subr.mxu0 %v355
    %695 = vmatpush2.msra.mxu0 %v354
    %696 = vmatprep.mubr.f32.mxu0 %v219
    %697 = vmatmul.mubr.f32.gmra.mxu0 %v218
    %v698 = vpop.f32.mrf.mxu0
    %v699 = vadd.f32 0.0, %v698
    %v700 = vpop.f32.mrf.mxu0
    %v701 = vadd.f32 0.0, %v700
    %702 = vmatprep.mubr.f32.mxu0 %v221
    %703 = vmatmul.mubr.f32.gmra.mxu0 %v220
    %v704 = vpop.f32.mrf.mxu0
    %v705 = vadd.f32 0.0, %v704
    %v706 = vpop.f32.mrf.mxu0
    %v707 = vadd.f32 0.0, %v706
    %708 = vdwg.mxu0
    %709 = vmatprep.subr.mxu0 %v349
    %710 = vmatpush1.msra.mxu0 %v348
    %711 = vmatprep.subr.mxu0 %v341
    %712 = vmatpush1.msra.mxu0 %v340
    %713 = vmatprep.subr.mxu0 %v333
    %714 = vmatpush1.msra.mxu0 %v332
    %715 = vmatprep.subr.mxu0 %v325
    %716 = vmatpush1.msra.mxu0 %v324
    %717 = vmatprep.subr.mxu0 %v317
    %718 = vmatpush1.msra.mxu0 %v316
    %719 = vmatprep.subr.mxu0 %v309
    %720 = vmatpush1.msra.mxu0 %v308
    %721 = vmatprep.subr.mxu0 %v301
    %722 = vmatpush1.msra.mxu0 %v300
    %723 = vmatprep.subr.mxu0 %v293
    %724 = vmatpush1.msra.mxu0 %v292
    %725 = vmatprep.subr.mxu0 %v285
    %726 = vmatpush1.msra.mxu0 %v284
    %727 = vmatprep.subr.mxu0 %v277
    %728 = vmatpush1.msra.mxu0 %v276
    %729 = vmatprep.subr.mxu0 %v269
    %730 = vmatpush1.msra.mxu0 %v268
    %731 = vmatprep.subr.mxu0 %v261
    %732 = vmatpush1.msra.mxu0 %v260
    %733 = vmatprep.subr.mxu0 %v253
    %734 = vmatpush1.msra.mxu0 %v252
    %735 = vmatprep.subr.mxu0 %v245
    %736 = vmatpush1.msra.mxu0 %v244
    %737 = vmatprep.subr.mxu0 %v237
    %738 = vmatpush1.msra.mxu0 %v236
    %739 = vmatprep.subr.mxu0 %v229
    %740 = vmatpush1.msra.mxu0 %v228
    %741 = vmatprep.subr.mxu0 %v477
    %742 = vmatpush2.msra.mxu0 %v476
    %743 = vmatprep.subr.mxu0 %v469
    %744 = vmatpush2.msra.mxu0 %v468
    %745 = vmatprep.subr.mxu0 %v461
    %746 = vmatpush2.msra.mxu0 %v460
    %747 = vmatprep.subr.mxu0 %v453
    %748 = vmatpush2.msra.mxu0 %v452
    %749 = vmatprep.subr.mxu0 %v445
    %750 = vmatpush2.msra.mxu0 %v444
    %751 = vmatprep.subr.mxu0 %v437
    %752 = vmatpush2.msra.mxu0 %v436
    %753 = vmatprep.subr.mxu0 %v429
    %754 = vmatpush2.msra.mxu0 %v428
    %755 = vmatprep.subr.mxu0 %v421
    %756 = vmatpush2.msra.mxu0 %v420
    %757 = vmatprep.subr.mxu0 %v413
    %758 = vmatpush2.msra.mxu0 %v412
    %759 = vmatprep.subr.mxu0 %v405
    %760 = vmatpush2.msra.mxu0 %v404
    %761 = vmatprep.subr.mxu0 %v397
    %762 = vmatpush2.msra.mxu0 %v396
    %763 = vmatprep.subr.mxu0 %v389
    %764 = vmatpush2.msra.mxu0 %v388
    %765 = vmatprep.subr.mxu0 %v381
    %766 = vmatpush2.msra.mxu0 %v380
    %767 = vmatprep.subr.mxu0 %v373
    %768 = vmatpush2.msra.mxu0 %v372
    %769 = vmatprep.subr.mxu0 %v365
    %770 = vmatpush2.msra.mxu0 %v364
    %771 = vmatprep.subr.mxu0 %v357
    %772 = vmatpush2.msra.mxu0 %v356
    %773 = vmatprep.mubr.f32.mxu0 %v219
    %774 = vmatmul.mubr.f32.gmra.mxu0 %v218
    %v775 = vpop.f32.mrf.mxu0
    %v776 = vadd.f32 0.0, %v775
    %v777 = vpop.f32.mrf.mxu0
    %v778 = vadd.f32 0.0, %v777
    %779 = vmatprep.mubr.f32.mxu0 %v221
    %780 = vmatmul.mubr.f32.gmra.mxu0 %v220
    %v781 = vpop.f32.mrf.mxu0
    %v782 = vadd.f32 0.0, %v781
    %v783 = vpop.f32.mrf.mxu0
    %v784 = vadd.f32 0.0, %v783
    %785 = vdwg.mxu0
    %786 = vst [vmem:[#allocation6] sm:$0xff] %v545
    %787 = vst [vmem:[#allocation6 + $0x8] sm:$0xff] %v547
    %788 = vst [vmem:[#allocation6 + $0x10] sm:$0xff] %v622
    %789 = vst [vmem:[#allocation6 + $0x18] sm:$0xff] %v624
    %790 = vst [vmem:[#allocation6 + $0x20] sm:$0xff] %v699
    %791 = vst [vmem:[#allocation6 + $0x28] sm:$0xff] %v701
    %792 = vst [vmem:[#allocation6 + $0x30] sm:$0xff] %v776
    %793 = vst [vmem:[#allocation6 + $0x38] sm:$0xff] %v778
    %794 = vst [vmem:[#allocation6 + $0x40] sm:$0xff] %v551
    %795 = vst [vmem:[#allocation6 + $0x48] sm:$0xff] %v553
    %796 = vst [vmem:[#allocation6 + $0x50] sm:$0xff] %v628
    %797 = vst [vmem:[#allocation6 + $0x58] sm:$0xff] %v630
    %798 = vst [vmem:[#allocation6 + $0x60] sm:$0xff] %v705
    %799 = vst [vmem:[#allocation6 + $0x68] sm:$0xff] %v707
    %800 = vst [vmem:[#allocation6 + $0x70] sm:$0xff] %v782
    %801 = vst [vmem:[#allocation6 + $0x78] sm:$0xff] %v784
    // Predicated region
    $region22: #{tpu_custom_call.1} parent=1 // pred_check
      _
    $region23: #{tpu_custom_call.1} parent=1 // pred_check_branch
      %803 = sbr.rel (0) target = $region25
    $region24: #{tpu_custom_call.1} parent=1 // pred_region
      %s805 = ssub.s32 2048, 2048
      %806 = vsyncadd [#allocation5], %s805
      %s807 = sshll.u32 [#allocation6], 4
      %s808 = int_to_ptr.vmem [resolvable:$true] %s807
      %813 = dma.vmem_to_hbm [thread:$0]  %s808, 2048, %s3, [#allocation5], 1024, 1024, 64
    $region25: #{tpu_custom_call.1} parent=1 // pred_fallthru
      _
    // Predicated region
    $region26: #{tpu_custom_call.1} parent=1 // pred_check
      _
    $region27: #{tpu_custom_call.1} parent=1 // pred_check_branch
      %815 = sbr.rel (0) target = $region29
    $region28: #{tpu_custom_call.1} parent=1 // pred_region
      %816 = dma.done [#allocation5], 2048
    $region29: #{tpu_custom_call.1} parent=1 // pred_fallthru
      _
    %817 = vsyncpa [#allocation4], 1
    %818 = vsyncpa [#allocation5], 1

</llo_original>
